<compile_context>
chip_gen: v6e
topology: v6e:2x2x1
jax: 0.10.0
libtpu: 0.0.40
codegen_flags: <defaults>
</compile_context>

<pallas_src>
import functools
import math

import jax
import jax.numpy as jnp
from jax.experimental import pallas as pl
from jax.experimental.pallas import tpu as pltpu

_LANE = 128


def _round_up(x, m):
    return (x + m - 1) // m * m


def _sublane(dtype):
    # f32 -> 8 rows per vreg, bf16 -> 16, int8/fp8 -> 32.
    return max(8, 32 // jnp.dtype(dtype).itemsize)


@functools.lru_cache(maxsize=1)
def _tpu_vmem_budget_and_mxu():
    """Per-TensorCore VMEM budget (bytes) and preferred MXU tile width."""
    kind = ""
    try:
        kind = jax.devices()[0].device_kind.lower()
    except Exception:  # noqa: BLE001 - fall back to conservative defaults
        pass
    cap = 64 << 20                                  # conservative: v7x per-TC
    try:
        cap = int(pltpu.get_tpu_info().vmem_capacity_bytes)
    except Exception:  # noqa: BLE001
        pass
    budget = min(cap - (8 << 20), 100 << 20)        # headroom below physical
    if "v7" in kind:
        budget = min(budget, 56 << 20)              # 64 MiB/TC on v7x
    budget = max(budget, 16 << 20)
    mxu = 256 if ("v6" in kind or "v7" in kind) else 128   # v5e MXU is 128-wide
    return budget, mxu


def _pad_dim(d, mxu_align):
    """Pad a feature dim to 128 lanes; to 256 on v6e/v7x when <15% extra FLOPs."""
    p128 = _round_up(d, _LANE)
    if mxu_align >= 256:
        p256 = _round_up(d, 256)
        if p256 <= 1.15 * p128:
            return p256
    return p128


def prepare_mlp_params(params, *, compute_dtype=jnp.bfloat16, mxu_align=None):
    """One-time padding + cast of MLP weights (hoisted out of the hot path).

    params: list of (w: (fan_in, fan_out), b: (fan_out,)).
    Zero padding is exact: padded input cols hit zero weight rows; padded
    output cols get zero weight/bias (relu(0)=0) and feed zero rows of the
    next layer's weight.  Use compute_dtype=jnp.float32 for full precision.
    """
    if mxu_align is None:
        _, mxu_align = _tpu_vmem_budget_and_mxu()

    dims_in = [int(w.shape[0]) for (w, _) in params]
    dims_out = [int(w.shape[1]) for (w, _) in params]
    for i in range(len(params) - 1):
        assert dims_out[i] == dims_in[i + 1], "layer dims must chain"
    pin = [_pad_dim(d, mxu_align) for d in dims_in]
    pout = [_pad_dim(d, mxu_align) for d in dims_out]

    weights = []
    for li, (w, _) in enumerate(params):
        wp = jnp.zeros((pin[li], pout[li]), compute_dtype)
        wp = wp.at[:dims_in[li], :dims_out[li]].set(w.astype(compute_dtype))
        weights.append(wp)

    max_pout = max(pout)
    biases = jnp.zeros((len(params), max_pout), jnp.float32)
    for li, (_, b) in enumerate(params):
        biases = biases.at[li, :dims_out[li]].set(b.astype(jnp.float32))

    return dict(weights=weights, biases=biases,
                dims_in=tuple(dims_in), dims_out=tuple(dims_out),
                pin=tuple(pin), pout=tuple(pout), compute_dtype=compute_dtype)


def _mlp_fused_kernel(x_ref, *refs, num_layers, pout, apply_final_relu,
                      compute_dtype):
    """Fused MLP over one batch tile.  refs = (w0..w_{L-1}, b_stack, o_ref).

    Hidden activations stay as VMEM values inside the grid step (no HBM
    round-trips between layers).
    """
    b_ref = refs[num_layers]
    o_ref = refs[num_layers + 1]

    h = x_ref[...].astype(compute_dtype)
    y = None
    for i in range(num_layers):
        w_ref = refs[i]
        # MXU matmul (bf16 inputs), f32 accumulation.
        y = jnp.dot(h, w_ref[...], preferred_element_type=jnp.float32)
        # Bias add (f32, VPU); bias row i of the stacked bias array.
        y = y + b_ref[i:i + 1, :pout[i]]
        last = i == num_layers - 1
        if (not last) or apply_final_relu:
            y = jnp.maximum(y, 0.0)       # ReLU; dropout p=0.0 -> identity
        if not last:
            h = y.astype(compute_dtype)
    o_ref[...] = y.astype(o_ref.dtype)


def _choose_tm(n, sublane, m_align, tile_budget_bytes, bytes_per_row,
               max_rows=1024):
    """Largest MXU-friendly batch tile that fits the VMEM tile budget without
    excessive last-tile padding waste."""
    n_up = _round_up(max(n, 1), sublane)
    cands = {c for c in (1024, 512, 256, 128) if c % sublane == 0}
    if n_up <= max_rows:
        cands.add(n_up)
    cands.add(sublane)
    cands = sorted(cands, reverse=True)

    fitting = [c for c in cands
               if c <= max_rows and c * bytes_per_row <= tile_budget_bytes]
    if not fitting:
        fitting = [min(cands)]

    def waste(c):
        return _round_up(n_up, c) - n_up

    good = [c for c in fitting if waste(c) <= 0.15 * n_up]
    if good:
        aligned = [c for c in good if c % m_align == 0 or c == n_up]
        return max(aligned) if aligned else max(good)
    return min(fitting, key=lambda c: (waste(c), -c))


def _fused_group_call(x_p, weights, biases, pin, pout, *, tm, out_dtype,
                      compute_dtype, apply_final_relu, vmem_limit):
    """One pallas_call fusing a group of consecutive layers over the batch grid."""
    n_pad = x_p.shape[0]
    num_layers = len(weights)
    grid = (n_pad // tm,)

    # Loop-invariant inputs: fetched once, single-buffered (halves weight VMEM).
    single = pl.Buffered(buffer_count=1)
    in_specs = [pl.BlockSpec((tm, pin[0]), lambda i: (i, 0))]
    for w in weights:
        in_specs.append(
            pl.BlockSpec(w.shape, lambda i: (0, 0), pipeline_mode=single))
    in_specs.append(
        pl.BlockSpec(biases.shape, lambda i: (0, 0), pipeline_mode=single))
    out_specs = pl.BlockSpec((tm, pout[-1]), lambda i: (i, 0))

    flops = 2 * n_pad * sum(pi * po for pi, po in zip(pin, pout))
    bytes_accessed = (x_p.size * x_p.dtype.itemsize
                      + sum(w.size * w.dtype.itemsize for w in weights)
                      + biases.size * biases.dtype.itemsize
                      + n_pad * pout[-1] * jnp.dtype(out_dtype).itemsize)

    kernel = functools.partial(
        _mlp_fused_kernel, num_layers=num_layers, pout=tuple(pout),
        apply_final_relu=apply_final_relu, compute_dtype=compute_dtype)

    return pl.pallas_call(
        kernel,
        out_shape=jax.ShapeDtypeStruct((n_pad, pout[-1]), out_dtype),
        grid=grid,
        in_specs=in_specs,
        out_specs=out_specs,
        compiler_params=pltpu.CompilerParams(
            dimension_semantics=("parallel",),   # batch axis over 2 TCs (v7x)
            vmem_limit_bytes=int(vmem_limit),
        ),
        cost_estimate=pl.CostEstimate(
            flops=int(flops), transcendentals=0,
            bytes_accessed=int(bytes_accessed)),
    )(x_p, *weights, biases)


def mlp_forward(x, params, *, compute_dtype=jnp.bfloat16, out_dtype=None,
                block_rows=1024):
    """Fused MLP forward.

    x: (N, Cin).  params: output of prepare_mlp_params (preferred for repeated
    calls) or a raw list of (w, b) pairs (prepared on the fly).
    Returns (N, Cout) in out_dtype (defaults to x.dtype).
    """
    if not isinstance(params, dict):
        params = prepare_mlp_params(params, compute_dtype=compute_dtype)
    compute_dtype = params["compute_dtype"]
    out_dtype = jnp.dtype(x.dtype if out_dtype is None else out_dtype)

    weights, biases = params["weights"], params["biases"]
    pin, pout = params["pin"], params["pout"]
    dims_in, dims_out = params["dims_in"], params["dims_out"]
    num_layers = len(weights)

    n, cin = x.shape
    assert cin == dims_in[0], "input feature dim mismatch"

    vmem_budget, mxu_align = _tpu_vmem_budget_and_mxu()

    # --- Group layers so each group's resident weights fit per-TC VMEM. ---
    wb_bytes = [int(w.size) * w.dtype.itemsize for w in weights]
    bias_bytes = int(biases.size) * biases.dtype.itemsize
    weight_budget = int(0.6 * vmem_budget)
    groups, cur, cur_bytes = [], [], 0
    for li in range(num_layers):
        if cur and cur_bytes + wb_bytes[li] > weight_budget:
            groups.append(cur)
            cur, cur_bytes = [], 0
        cur.append(li)
        cur_bytes += wb_bytes[li]
    groups.append(cur)

    # --- Batch tile selection (dtype-aware sublane, MXU-aligned, VMEM-fit). ---
    sublanes = [_sublane(x.dtype), _sublane(out_dtype)]
    if len(groups) > 1:
        sublanes.append(_sublane(compute_dtype))   # inter-group activations
    sub = max(sublanes)

    max_group_w = max(sum(wb_bytes[li] for li in g) for g in groups)
    tile_budget = vmem_budget - max_group_w - bias_bytes - (2 << 20)
    max_dim = max(max(pin), max(pout))
    bytes_per_row = 2 * max(pin) * 4 + 2 * max(pout) * 4 + 3 * max_dim * 4
    tm = _choose_tm(n, sub, mxu_align, max(tile_budget, 1 << 20),
                    bytes_per_row, max_rows=block_rows)
    n_pad = _round_up(n, tm)

    # --- Pad x once (skipped when already aligned). ---
    h = x
    if (n_pad, pin[0]) != (n, cin):
        h = jnp.zeros((n_pad, pin[0]), x.dtype).at[:n, :cin].set(x)

    # --- Run each fused group (usually exactly one). ---
    for gi, g in enumerate(groups):
        first, last = g[0], g[-1]
        g_w = [weights[li] for li in g]
        g_b = biases if len(groups) == 1 else biases[first:last + 1]
        g_pin = [pin[li] for li in g]
        g_pout = [pout[li] for li in g]
        is_last_group = gi == len(groups) - 1
        g_out_dtype = out_dtype if is_last_group else compute_dtype

        g_w_bytes = sum(wb_bytes[li] for li in g)
        vmem_needed = (g_w_bytes                               # Buffered(1)
                       + int(g_b.size) * g_b.dtype.itemsize    # Buffered(1)
                       + 2 * tm * g_pin[0] * h.dtype.itemsize  # x, 2-buffered
                       + 2 * tm * g_pout[-1] * jnp.dtype(g_out_dtype).itemsize
                       + 4 * tm * max(max(g_pin), max(g_pout)) * 4)
        vmem_limit = min(max(vmem_needed + (4 << 20), 16 << 20), vmem_budget)

        h = _fused_group_call(
            h, g_w, g_b, g_pin, g_pout, tm=tm, out_dtype=g_out_dtype,
            compute_dtype=compute_dtype,
            apply_final_relu=not is_last_group,   # ReLU between layers only
            vmem_limit=vmem_limit)

    out = h
    if (n_pad, pout[-1]) != (n, dims_out[-1]):
        out = out[:n, :dims_out[-1]]
    return out


def init_mlp_params(key, in_channels, hidden_channels, out_channels, num_layers,
                    dtype=jnp.float32):
    """Mirror torch.nn.Linear default init (uniform +-1/sqrt(fan_in)).
    Weights are stored (fan_in, fan_out) so the kernel does x @ W directly."""
    if num_layers == 1:
        dims = [(in_channels, out_channels)]
    else:
        dims = [(in_channels, hidden_channels)]
        dims += [(hidden_channels, hidden_channels)] * (num_layers - 2)
        dims += [(hidden_channels, out_channels)]

    params = []
    for (fan_in, fan_out) in dims:
        key, kw, kb = jax.random.split(key, 3)
        bound = 1.0 / math.sqrt(fan_in)
        w = jax.random.uniform(kw, (fan_in, fan_out), dtype, -bound, bound)
        b = jax.random.uniform(kb, (fan_out,), dtype, -bound, bound)
        params.append((w, b))
    return params


if __name__ == "__main__":
    key = jax.random.PRNGKey(0)
    k_in, k_param = jax.random.split(key)

    batch = 8
    in_channels = 16
    hidden_channels = 32
    out_channels = 8
    num_layers = 3

    x = jax.random.normal(k_in, (batch, in_channels), jnp.float32)
    params = init_mlp_params(k_param, in_channels, hidden_channels,
                             out_channels, num_layers)

    prepared = prepare_mlp_params(params)          # one-time pad + bf16 cast
    out = mlp_forward(x, prepared)
    jax.block_until_ready(out)
    assert out.shape == (batch, out_channels)

    # Reference emulating the kernel's bf16 MXU inputs / f32 accumulation.
    ref = x
    for i, (w, b) in enumerate(params):
        ref = jnp.dot(ref.astype(jnp.bfloat16), w.astype(jnp.bfloat16),
                      preferred_element_type=jnp.float32) + b.reshape(1, -1)
        if i < len(params) - 1:
            ref = jnp.maximum(ref, 0.0)
    assert jnp.allclose(out, ref, atol=2e-3, rtol=2e-3), (
        float(jnp.max(jnp.abs(out - ref))))

    # Loose sanity check against the pure-f32 math of the original module.
    ref32 = x
    for i, (w, b) in enumerate(params):
        ref32 = ref32 @ w + b.reshape(1, -1)
        if i < len(params) - 1:
            ref32 = jnp.maximum(ref32, 0.0)
    assert jnp.allclose(out, ref32, atol=5e-2, rtol=5e-2)

    print("KERNEL_OK")
</pallas_src>

<mosaic_0001>
module attributes {stable_mosaic.version = 11 : i64} {
  func.func @_mlp_fused_kernel(%arg0: i32, %arg1: memref<8x128xf32, #tpu.memory_space<vmem>>, %arg2: memref<128x128xbf16, #tpu.memory_space<vmem>>, %arg3: memref<128x128xbf16, #tpu.memory_space<vmem>>, %arg4: memref<128x128xbf16, #tpu.memory_space<vmem>>, %arg5: memref<3x128xf32, #tpu.memory_space<vmem>>, %arg6: memref<8x128xf32, #tpu.memory_space<vmem>>) attributes {dimension_semantics = [#tpu.dimension_semantics<parallel>], iteration_bounds = array<i64: 1>, scalar_prefetch = 0 : i64, scratch_operands = 0 : i64, tpu.core_type = #tpu.core_type<tc>, window_params = [{transform_indices = @transform_0, window_bounds = array<i64: 8, 128>}, {pipeline_mode = #tpu.pipeline_mode<synchronous>, transform_indices = @transform_1, window_bounds = array<i64: 128, 128>}, {pipeline_mode = #tpu.pipeline_mode<synchronous>, transform_indices = @transform_2, window_bounds = array<i64: 128, 128>}, {pipeline_mode = #tpu.pipeline_mode<synchronous>, transform_indices = @transform_3, window_bounds = array<i64: 128, 128>}, {pipeline_mode = #tpu.pipeline_mode<synchronous>, transform_indices = @transform_4, window_bounds = array<i64: 3, 128>}, {transform_indices = @transform_5, window_bounds = array<i64: 8, 128>}]} {
    %c0 = arith.constant 0 : index
    %c0_0 = arith.constant 0 : index
    %0 = vector.load %arg1[%c0, %c0_0] : memref<8x128xf32, #tpu.memory_space<vmem>>, vector<8x128xf32>
    %1 = arith.truncf %0 : vector<8x128xf32> to vector<8x128xbf16>
    %c0_1 = arith.constant 0 : index
    %c0_2 = arith.constant 0 : index
    %2 = vector.load %arg2[%c0_1, %c0_2] : memref<128x128xbf16, #tpu.memory_space<vmem>>, vector<128x128xbf16>
    %cst = arith.constant dense<0.000000e+00> : vector<8x128xf32>
    %3 = tpu.matmul %1, %2, %cst {dimension_numbers = #tpu.dot_dimension_numbers<[1], [0], [0], [1], [0, 0, 1, 1], [], []>} : vector<8x128xbf16>, vector<128x128xbf16>, vector<8x128xf32> -> vector<8x128xf32>
    %c0_3 = arith.constant 0 : index
    %c0_4 = arith.constant 0 : index
    %4 = vector.load %arg5[%c0_3, %c0_4] : memref<3x128xf32, #tpu.memory_space<vmem>>, vector<1x128xf32>
    %5 = vector.broadcast %4 : vector<1x128xf32> to vector<8x128xf32>
    %6 = arith.addf %3, %5 : vector<8x128xf32>
    %cst_5 = arith.constant 0.000000e+00 : f32
    %7 = vector.broadcast %cst_5 : f32 to vector<8x128xf32>
    %8 = arith.maximumf %6, %7 : vector<8x128xf32>
    %9 = arith.truncf %8 : vector<8x128xf32> to vector<8x128xbf16>
    %c0_6 = arith.constant 0 : index
    %c0_7 = arith.constant 0 : index
    %10 = vector.load %arg3[%c0_6, %c0_7] : memref<128x128xbf16, #tpu.memory_space<vmem>>, vector<128x128xbf16>
    %cst_8 = arith.constant dense<0.000000e+00> : vector<8x128xf32>
    %11 = tpu.matmul %9, %10, %cst_8 {dimension_numbers = #tpu.dot_dimension_numbers<[1], [0], [0], [1], [0, 0, 1, 1], [], []>} : vector<8x128xbf16>, vector<128x128xbf16>, vector<8x128xf32> -> vector<8x128xf32>
    %c1 = arith.constant 1 : index
    %c0_9 = arith.constant 0 : index
    %12 = vector.load %arg5[%c1, %c0_9] : memref<3x128xf32, #tpu.memory_space<vmem>>, vector<1x128xf32>
    %13 = vector.broadcast %12 : vector<1x128xf32> to vector<8x128xf32>
    %14 = arith.addf %11, %13 : vector<8x128xf32>
    %cst_10 = arith.constant 0.000000e+00 : f32
    %15 = vector.broadcast %cst_10 : f32 to vector<8x128xf32>
    %16 = arith.maximumf %14, %15 : vector<8x128xf32>
    %17 = arith.truncf %16 : vector<8x128xf32> to vector<8x128xbf16>
    %c0_11 = arith.constant 0 : index
    %c0_12 = arith.constant 0 : index
    %18 = vector.load %arg4[%c0_11, %c0_12] : memref<128x128xbf16, #tpu.memory_space<vmem>>, vector<128x128xbf16>
    %cst_13 = arith.constant dense<0.000000e+00> : vector<8x128xf32>
    %19 = tpu.matmul %17, %18, %cst_13 {dimension_numbers = #tpu.dot_dimension_numbers<[1], [0], [0], [1], [0, 0, 1, 1], [], []>} : vector<8x128xbf16>, vector<128x128xbf16>, vector<8x128xf32> -> vector<8x128xf32>
    %c2 = arith.constant 2 : index
    %c0_14 = arith.constant 0 : index
    %20 = vector.load %arg5[%c2, %c0_14] : memref<3x128xf32, #tpu.memory_space<vmem>>, vector<1x128xf32>
    %21 = vector.broadcast %20 : vector<1x128xf32> to vector<8x128xf32>
    %22 = arith.addf %19, %21 : vector<8x128xf32>
    %c0_15 = arith.constant 0 : index
    %c0_16 = arith.constant 0 : index
    %23 = vector.load %arg6[%c0_15, %c0_16] : memref<8x128xf32, #tpu.memory_space<vmem>>, vector<8x128xf32>
    tpu.vector_store %arg6[%c0_15, %c0_16], %22 {strides = array<i32>} : memref<8x128xf32, #tpu.memory_space<vmem>>, vector<8x128xf32>,
    return
  }
  func.func @transform_0(%arg0: i32) -> (i32, i32) {
    %c0_i32 = arith.constant 0 : i32
    %c0_i32_0 = arith.constant 0 : i32
    return %arg0, %c0_i32 : i32, i32
  }
  func.func @transform_1(%arg0: i32) -> (i32, i32) {
    %c0_i32 = arith.constant 0 : i32
    %c0_i32_0 = arith.constant 0 : i32
    %c0_i32_1 = arith.constant 0 : i32
    return %c0_i32, %c0_i32_0 : i32, i32
  }
  func.func @transform_2(%arg0: i32) -> (i32, i32) {
    %c0_i32 = arith.constant 0 : i32
    %c0_i32_0 = arith.constant 0 : i32
    %c0_i32_1 = arith.constant 0 : i32
    return %c0_i32, %c0_i32_0 : i32, i32
  }
  func.func @transform_3(%arg0: i32) -> (i32, i32) {
    %c0_i32 = arith.constant 0 : i32
    %c0_i32_0 = arith.constant 0 : i32
    %c0_i32_1 = arith.constant 0 : i32
    return %c0_i32, %c0_i32_0 : i32, i32
  }
  func.func @transform_4(%arg0: i32) -> (i32, i32) {
    %c0_i32 = arith.constant 0 : i32
    %c0_i32_0 = arith.constant 0 : i32
    %c0_i32_1 = arith.constant 0 : i32
    return %c0_i32, %c0_i32_0 : i32, i32
  }
  func.func @transform_5(%arg0: i32) -> (i32, i32) {
    %c0_i32 = arith.constant 0 : i32
    %c0_i32_0 = arith.constant 0 : i32
    return %arg0, %c0_i32 : i32, i32
  }
}

</mosaic_0001>

<llo_original>
// kernel: tpu_custom_call.1
$region0: #{tpu_custom_call.1}
  #allocation0 [shape = 'u32[]', space=smem, size = 0x4, offset = 0x4, fixed_abs, tag = 'smem constant byte address 0x4 - core index']
  #allocation1 [shape = 'u32[144,128]{1,0:T(1,128)}', space=vmem, size = 0x12000, scoped, tag = 'internal scratch']
  %s0 = inlined_call_operand.hbm [shape: f32[8,128], index: 0, kind: input, shape index: {}]
  %s1 = inlined_call_operand.hbm [shape: bf16[128,128], index: 1, kind: input, shape index: {}]
  %s2 = inlined_call_operand.hbm [shape: bf16[128,128], index: 2, kind: input, shape index: {}]
  %s3 = inlined_call_operand.hbm [shape: bf16[128,128], index: 3, kind: input, shape index: {}]
  %s4 = inlined_call_operand.vmem [shape: f32[3,128], index: 4, kind: input, shape index: {}]
  %s5 = inlined_call_operand.hbm [shape: f32[8,128], index: 5, kind: output, shape index: {}]
  %s6 = sld [smem:[#allocation0]]
  $region46: #{tpu_custom_call.1} parent=0
    _
  %s8 = ssub.s32 1, %s6
  %s9 = scalar_select 0, %s8, %s6
  $region1: #{tpu_custom_call.1} parent=0
    #allocation2 [shape = 'u8[4096]{0}', space=vmem, size = 0x1000, scoped, tag = 'input window, operand 0, single buffered']
    #allocation3 [shape = 's32[1]{0}', space=sflag, size = 0x4, scoped, tag = 'scoped memory for tpu_custom_call.1']
    #allocation4 [shape = 's32[1]{0}', space=sflag, size = 0x4, scoped, tag = 'scoped memory for tpu_custom_call.1']
    #allocation5 [shape = 'u8[32768]{0}', space=vmem, size = 0x8000, scoped, tag = 'input window, operand 1, single buffered']
    #allocation6 [shape = 's32[1]{0}', space=sflag, size = 0x4, scoped, tag = 'scoped memory for tpu_custom_call.1']
    #allocation7 [shape = 'u8[32768]{0}', space=vmem, size = 0x8000, scoped, tag = 'input window, operand 2, single buffered']
    #allocation8 [shape = 'u8[32768]{0}', space=vmem, size = 0x8000, scoped, tag = 'input window, operand 3, single buffered']
    #allocation9 [shape = 's32[1]{0}', space=sflag, size = 0x4, scoped, tag = 'scoped memory for tpu_custom_call.1']
    #allocation10 [shape = 'u8[4096]{0}', space=vmem, size = 0x1000, scoped, tag = 'output window, operand 0, single buffered']
    %10 = vsyncpa [#allocation3], 0
    %11 = vsyncpa [#allocation6], 0
    %12 = vsyncpa [#allocation9], 0
    %13 = vsyncpa [#allocation4], 0
    // Predicated region
    $region2: #{tpu_custom_call.1} parent=1 // pred_check
      _
    $region3: #{tpu_custom_call.1} parent=1 // pred_check_branch
      %15 = sbr.rel (0) target = $region5
    $region4: #{tpu_custom_call.1} parent=1 // pred_region
      %s17 = ssub.s32 128, 128
      %18 = vsyncadd [#allocation3], %s17
      %s20 = sshll.u32 [#allocation2], 4
      %s21 = int_to_ptr.vmem [resolvable:$true] %s20
      %23 = dma.hbm_to_vmem [thread:$0]  %s0, 128, %s21, [#allocation3]
    $region5: #{tpu_custom_call.1} parent=1 // pred_fallthru
      _
    // Predicated region
    $region6: #{tpu_custom_call.1} parent=1 // pred_check
      _
    $region7: #{tpu_custom_call.1} parent=1 // pred_check_branch
      %25 = sbr.rel (0) target = $region9
    $region8: #{tpu_custom_call.1} parent=1 // pred_region
      %s27 = ssub.s32 1024, 1024
      %28 = vsyncadd [#allocation6], %s27
      %s29 = sshll.u32 [#allocation5], 4
      %s30 = int_to_ptr.vmem [resolvable:$true] %s29
      %35 = dma.hbm_to_vmem [thread:$0]  %s1, 1024, %s30, [#allocation6], 64, 64, 4
    $region9: #{tpu_custom_call.1} parent=1 // pred_fallthru
      _
    // Predicated region
    $region10: #{tpu_custom_call.1} parent=1 // pred_check
      _
    $region11: #{tpu_custom_call.1} parent=1 // pred_check_branch
      %37 = sbr.rel (0) target = $region13
    $region12: #{tpu_custom_call.1} parent=1 // pred_region
      %s39 = ssub.s32 1024, 1024
      %40 = vsyncadd [#allocation6], %s39
      %s41 = sshll.u32 [#allocation7], 4
      %s42 = int_to_ptr.vmem [resolvable:$true] %s41
      %47 = dma.hbm_to_vmem [thread:$0]  %s2, 1024, %s42, [#allocation6], 64, 64, 4
    $region13: #{tpu_custom_call.1} parent=1 // pred_fallthru
      _
    // Predicated region
    $region14: #{tpu_custom_call.1} parent=1 // pred_check
      _
    $region15: #{tpu_custom_call.1} parent=1 // pred_check_branch
      %49 = sbr.rel (0) target = $region17
    $region16: #{tpu_custom_call.1} parent=1 // pred_region
      %s51 = ssub.s32 1024, 1024
      %52 = vsyncadd [#allocation9], %s51
      %s53 = sshll.u32 [#allocation8], 4
      %s54 = int_to_ptr.vmem [resolvable:$true] %s53
      %59 = dma.hbm_to_vmem [thread:$0]  %s3, 1024, %s54, [#allocation9], 64, 64, 4
    $region17: #{tpu_custom_call.1} parent=1 // pred_fallthru
      _
    // Predicated region
    $region18: #{tpu_custom_call.1} parent=1 // pred_check
      _
    $region19: #{tpu_custom_call.1} parent=1 // pred_check_branch
      %61 = sbr.rel (0) target = $region21
    $region20: #{tpu_custom_call.1} parent=1 // pred_region
      _
    $region21: #{tpu_custom_call.1} parent=1 // pred_fallthru
      _
    // Predicated region
    $region22: #{tpu_custom_call.1} parent=1 // pred_check
      _
    $region23: #{tpu_custom_call.1} parent=1 // pred_check_branch
      %63 = sbr.rel (0) target = $region25
    $region24: #{tpu_custom_call.1} parent=1 // pred_region
      %64 = dma.done [#allocation3], 128
    $region25: #{tpu_custom_call.1} parent=1 // pred_fallthru
      _
    // Predicated region
    $region26: #{tpu_custom_call.1} parent=1 // pred_check
      _
    $region27: #{tpu_custom_call.1} parent=1 // pred_check_branch
      %66 = sbr.rel (0) target = $region29
    $region28: #{tpu_custom_call.1} parent=1 // pred_region
      %67 = dma.done [#allocation6], 1024
    $region29: #{tpu_custom_call.1} parent=1 // pred_fallthru
      _
    // Predicated region
    $region30: #{tpu_custom_call.1} parent=1 // pred_check
      _
    $region31: #{tpu_custom_call.1} parent=1 // pred_check_branch
      %69 = sbr.rel (0) target = $region33
    $region32: #{tpu_custom_call.1} parent=1 // pred_region
      %70 = dma.done [#allocation6], 1024
    $region33: #{tpu_custom_call.1} parent=1 // pred_fallthru
      _
    // Predicated region
    $region34: #{tpu_custom_call.1} parent=1 // pred_check
      _
    $region35: #{tpu_custom_call.1} parent=1 // pred_check_branch
      %72 = sbr.rel (0) target = $region37
    $region36: #{tpu_custom_call.1} parent=1 // pred_region
      %73 = dma.done [#allocation9], 1024
    $region37: #{tpu_custom_call.1} parent=1 // pred_fallthru
      _
    %v75 = vld [vmem:[#allocation2] sm:$0xff]
    %v76 = vpack.c.bf16 %v75, %v75
    %v77 = vld [vmem:[#allocation5] sm:$0xf]
    %v78 = vld [vmem:[#allocation5 + $0x4] sm:$0xf]
    %v79 = vld [vmem:[#allocation5 + $0x8] sm:$0xf]
    %v80 = vld [vmem:[#allocation5 + $0xc] sm:$0xf]
    %v81 = vld [vmem:[#allocation5 + $0x10] sm:$0xf]
    %v82 = vld [vmem:[#allocation5 + $0x14] sm:$0xf]
    %v83 = vld [vmem:[#allocation5 + $0x18] sm:$0xf]
    %v84 = vld [vmem:[#allocation5 + $0x1c] sm:$0xf]
    %v85 = vld [vmem:[#allocation5 + $0x20] sm:$0xf]
    %v86 = vld [vmem:[#allocation5 + $0x24] sm:$0xf]
    %v87 = vld [vmem:[#allocation5 + $0x28] sm:$0xf]
    %v88 = vld [vmem:[#allocation5 + $0x2c] sm:$0xf]
    %v89 = vld [vmem:[#allocation5 + $0x30] sm:$0xf]
    %v90 = vld [vmem:[#allocation5 + $0x34] sm:$0xf]
    %v91 = vld [vmem:[#allocation5 + $0x38] sm:$0xf]
    %v92 = vld [vmem:[#allocation5 + $0x3c] sm:$0xf]
    %v93 = vld [vmem:[%s4] sm:$0x1]
    %v94 = vlaneseq
    %v95 = vshrl.u32 %v94, 7
    %v96 = vsub.s32 0, %v95
    %v97 = vrot.slane %v93, %v96
    %v114 = vunpack.c.l.b16 %v77
    %v115 = vunpack.c.l.b16 %v78
    %v116 = vunpack.c.l.b16 %v79
    %v117 = vunpack.c.l.b16 %v80
    %v118 = vunpack.c.l.b16 %v81
    %v119 = vunpack.c.l.b16 %v82
    %v120 = vunpack.c.l.b16 %v83
    %v121 = vunpack.c.l.b16 %v84
    %v122 = vunpack.c.l.b16 %v85
    %v123 = vunpack.c.l.b16 %v86
    %v124 = vunpack.c.l.b16 %v87
    %v125 = vunpack.c.l.b16 %v88
    %v126 = vunpack.c.l.b16 %v89
    %v127 = vunpack.c.l.b16 %v90
    %v128 = vunpack.c.l.b16 %v91
    %v129 = vunpack.c.l.b16 %v92
    %v130 = vpack.c.b16 %v115, %v114
    %v131 = vpack.c.b16 %v117, %v116
    %v132 = vpack.c.b16 %v119, %v118
    %v133 = vpack.c.b16 %v121, %v120
    %v134 = vpack.c.b16 %v123, %v122
    %v135 = vpack.c.b16 %v125, %v124
    %v136 = vpack.c.b16 %v127, %v126
    %v137 = vpack.c.b16 %v129, %v128
    %146 = vmatprep.subr.bf16.mxu0 0
    %147 = vmatpush1.bf16.msra.mxu0 %v137
    %148 = vmatprep.subr.bf16.mxu0 0
    %149 = vmatpush1.bf16.msra.mxu0 %v136
    %150 = vmatprep.subr.bf16.mxu0 0
    %151 = vmatpush1.bf16.msra.mxu0 %v135
    %152 = vmatprep.subr.bf16.mxu0 0
    %153 = vmatpush1.bf16.msra.mxu0 %v134
    %154 = vmatprep.subr.bf16.mxu0 0
    %155 = vmatpush1.bf16.msra.mxu0 %v133
    %156 = vmatprep.subr.bf16.mxu0 0
    %157 = vmatpush1.bf16.msra.mxu0 %v132
    %158 = vmatprep.subr.bf16.mxu0 0
    %159 = vmatpush1.bf16.msra.mxu0 %v131
    %160 = vmatprep.subr.bf16.mxu0 0
    %161 = vmatpush1.bf16.msra.mxu0 %v130
    %162 = vmatprep.subr.bf16.mxu0 0
    %163 = vmatpush2.bf16.msra.mxu0 0
    %164 = vmatprep.subr.bf16.mxu0 0
    %165 = vmatpush2.bf16.msra.mxu0 0
    %166 = vmatprep.subr.bf16.mxu0 0
    %167 = vmatpush2.bf16.msra.mxu0 0
    %168 = vmatprep.subr.bf16.mxu0 0
    %169 = vmatpush2.bf16.msra.mxu0 0
    %170 = vmatprep.subr.bf16.mxu0 0
    %171 = vmatpush2.bf16.msra.mxu0 0
    %172 = vmatprep.subr.bf16.mxu0 0
    %173 = vmatpush2.bf16.msra.mxu0 0
    %174 = vmatprep.subr.bf16.mxu0 0
    %175 = vmatpush2.bf16.msra.mxu0 0
    %176 = vmatprep.subr.bf16.mxu0 0
    %177 = vmatpush2.bf16.msra.mxu0 0
    %178 = vmatprep.mubr.bf16.mxu0 0
    %179 = vmatmul.mubr.bf16.gmra.mxu0 %v76
    %v180 = vpop.f32.mrf.mxu0
    %v181 = vadd.f32 %v97, %v180
    %v182 = vpop.f32.mrf.mxu0
    %v183 = vpop.f32.mrf.mxu0
    %v184 = vpop.f32.mrf.mxu0
    %185 = vdwg.mxu0
    %v186 = vmax.f32 %v181, 0.0
    %v187 = vpack.c.bf16 %v186, %v186
    %v188 = vld [vmem:[#allocation7] sm:$0xf]
    %v189 = vld [vmem:[#allocation7 + $0x4] sm:$0xf]
    %v190 = vld [vmem:[#allocation7 + $0x8] sm:$0xf]
    %v191 = vld [vmem:[#allocation7 + $0xc] sm:$0xf]
    %v192 = vld [vmem:[#allocation7 + $0x10] sm:$0xf]
    %v193 = vld [vmem:[#allocation7 + $0x14] sm:$0xf]
    %v194 = vld [vmem:[#allocation7 + $0x18] sm:$0xf]
    %v195 = vld [vmem:[#allocation7 + $0x1c] sm:$0xf]
    %v196 = vld [vmem:[#allocation7 + $0x20] sm:$0xf]
    %v197 = vld [vmem:[#allocation7 + $0x24] sm:$0xf]
    %v198 = vld [vmem:[#allocation7 + $0x28] sm:$0xf]
    %v199 = vld [vmem:[#allocation7 + $0x2c] sm:$0xf]
    %v200 = vld [vmem:[#allocation7 + $0x30] sm:$0xf]
    %v201 = vld [vmem:[#allocation7 + $0x34] sm:$0xf]
    %v202 = vld [vmem:[#allocation7 + $0x38] sm:$0xf]
    %v203 = vld [vmem:[#allocation7 + $0x3c] sm:$0xf]
    %v204 = vld [vmem:[%s4 + $0x1] sm:$0x1]
    %v205 = vlaneseq
    %v206 = vshrl.u32 %v205, 7
    %v207 = vsub.s32 0, %v206
    %v208 = vrot.slane %v204, %v207
    %v225 = vunpack.c.l.b16 %v188
    %v226 = vunpack.c.l.b16 %v189
    %v227 = vunpack.c.l.b16 %v190
    %v228 = vunpack.c.l.b16 %v191
    %v229 = vunpack.c.l.b16 %v192
    %v230 = vunpack.c.l.b16 %v193
    %v231 = vunpack.c.l.b16 %v194
    %v232 = vunpack.c.l.b16 %v195
    %v233 = vunpack.c.l.b16 %v196
    %v234 = vunpack.c.l.b16 %v197
    %v235 = vunpack.c.l.b16 %v198
    %v236 = vunpack.c.l.b16 %v199
    %v237 = vunpack.c.l.b16 %v200
    %v238 = vunpack.c.l.b16 %v201
    %v239 = vunpack.c.l.b16 %v202
    %v240 = vunpack.c.l.b16 %v203
    %v241 = vpack.c.b16 %v226, %v225
    %v242 = vpack.c.b16 %v228, %v227
    %v243 = vpack.c.b16 %v230, %v229
    %v244 = vpack.c.b16 %v232, %v231
    %v245 = vpack.c.b16 %v234, %v233
    %v246 = vpack.c.b16 %v236, %v235
    %v247 = vpack.c.b16 %v238, %v237
    %v248 = vpack.c.b16 %v240, %v239
    %257 = vmatprep.subr.bf16.mxu0 0
    %258 = vmatpush1.bf16.msra.mxu0 %v248
    %259 = vmatprep.subr.bf16.mxu0 0
    %260 = vmatpush1.bf16.msra.mxu0 %v247
    %261 = vmatprep.subr.bf16.mxu0 0
    %262 = vmatpush1.bf16.msra.mxu0 %v246
    %263 = vmatprep.subr.bf16.mxu0 0
    %264 = vmatpush1.bf16.msra.mxu0 %v245
    %265 = vmatprep.subr.bf16.mxu0 0
    %266 = vmatpush1.bf16.msra.mxu0 %v244
    %267 = vmatprep.subr.bf16.mxu0 0
    %268 = vmatpush1.bf16.msra.mxu0 %v243
    %269 = vmatprep.subr.bf16.mxu0 0
    %270 = vmatpush1.bf16.msra.mxu0 %v242
    %271 = vmatprep.subr.bf16.mxu0 0
    %272 = vmatpush1.bf16.msra.mxu0 %v241
    %273 = vmatprep.subr.bf16.mxu0 0
    %274 = vmatpush2.bf16.msra.mxu0 0
    %275 = vmatprep.subr.bf16.mxu0 0
    %276 = vmatpush2.bf16.msra.mxu0 0
    %277 = vmatprep.subr.bf16.mxu0 0
    %278 = vmatpush2.bf16.msra.mxu0 0
    %279 = vmatprep.subr.bf16.mxu0 0
    %280 = vmatpush2.bf16.msra.mxu0 0
    %281 = vmatprep.subr.bf16.mxu0 0
    %282 = vmatpush2.bf16.msra.mxu0 0
    %283 = vmatprep.subr.bf16.mxu0 0
    %284 = vmatpush2.bf16.msra.mxu0 0
    %285 = vmatprep.subr.bf16.mxu0 0
    %286 = vmatpush2.bf16.msra.mxu0 0
    %287 = vmatprep.subr.bf16.mxu0 0
    %288 = vmatpush2.bf16.msra.mxu0 0
    %289 = vmatprep.mubr.bf16.mxu0 0
    %290 = vmatmul.mubr.bf16.gmra.mxu0 %v187
    %v291 = vpop.f32.mrf.mxu0
    %v292 = vadd.f32 %v208, %v291
    %v293 = vpop.f32.mrf.mxu0
    %v294 = vpop.f32.mrf.mxu0
    %v295 = vpop.f32.mrf.mxu0
    %296 = vdwg.mxu0
    %v297 = vmax.f32 %v292, 0.0
    %v298 = vpack.c.bf16 %v297, %v297
    %v299 = vld [vmem:[#allocation8] sm:$0xf]
    %v300 = vld [vmem:[#allocation8 + $0x4] sm:$0xf]
    %v301 = vld [vmem:[#allocation8 + $0x8] sm:$0xf]
    %v302 = vld [vmem:[#allocation8 + $0xc] sm:$0xf]
    %v303 = vld [vmem:[#allocation8 + $0x10] sm:$0xf]
    %v304 = vld [vmem:[#allocation8 + $0x14] sm:$0xf]
    %v305 = vld [vmem:[#allocation8 + $0x18] sm:$0xf]
    %v306 = vld [vmem:[#allocation8 + $0x1c] sm:$0xf]
    %v307 = vld [vmem:[#allocation8 + $0x20] sm:$0xf]
    %v308 = vld [vmem:[#allocation8 + $0x24] sm:$0xf]
    %v309 = vld [vmem:[#allocation8 + $0x28] sm:$0xf]
    %v310 = vld [vmem:[#allocation8 + $0x2c] sm:$0xf]
    %v311 = vld [vmem:[#allocation8 + $0x30] sm:$0xf]
    %v312 = vld [vmem:[#allocation8 + $0x34] sm:$0xf]
    %v313 = vld [vmem:[#allocation8 + $0x38] sm:$0xf]
    %v314 = vld [vmem:[#allocation8 + $0x3c] sm:$0xf]
    %v315 = vld [vmem:[%s4 + $0x2] sm:$0x1]
    %v316 = vlaneseq
    %v317 = vshrl.u32 %v316, 7
    %v318 = vsub.s32 0, %v317
    %v319 = vrot.slane %v315, %v318
    %v336 = vunpack.c.l.b16 %v299
    %v337 = vunpack.c.l.b16 %v300
    %v338 = vunpack.c.l.b16 %v301
    %v339 = vunpack.c.l.b16 %v302
    %v340 = vunpack.c.l.b16 %v303
    %v341 = vunpack.c.l.b16 %v304
    %v342 = vunpack.c.l.b16 %v305
    %v343 = vunpack.c.l.b16 %v306
    %v344 = vunpack.c.l.b16 %v307
    %v345 = vunpack.c.l.b16 %v308
    %v346 = vunpack.c.l.b16 %v309
    %v347 = vunpack.c.l.b16 %v310
    %v348 = vunpack.c.l.b16 %v311
    %v349 = vunpack.c.l.b16 %v312
    %v350 = vunpack.c.l.b16 %v313
    %v351 = vunpack.c.l.b16 %v314
    %v352 = vpack.c.b16 %v337, %v336
    %v353 = vpack.c.b16 %v339, %v338
    %v354 = vpack.c.b16 %v341, %v340
    %v355 = vpack.c.b16 %v343, %v342
    %v356 = vpack.c.b16 %v345, %v344
    %v357 = vpack.c.b16 %v347, %v346
    %v358 = vpack.c.b16 %v349, %v348
    %v359 = vpack.c.b16 %v351, %v350
    %368 = vmatprep.subr.bf16.mxu0 0
    %369 = vmatpush1.bf16.msra.mxu0 %v359
    %370 = vmatprep.subr.bf16.mxu0 0
    %371 = vmatpush1.bf16.msra.mxu0 %v358
    %372 = vmatprep.subr.bf16.mxu0 0
    %373 = vmatpush1.bf16.msra.mxu0 %v357
    %374 = vmatprep.subr.bf16.mxu0 0
    %375 = vmatpush1.bf16.msra.mxu0 %v356
    %376 = vmatprep.subr.bf16.mxu0 0
    %377 = vmatpush1.bf16.msra.mxu0 %v355
    %378 = vmatprep.subr.bf16.mxu0 0
    %379 = vmatpush1.bf16.msra.mxu0 %v354
    %380 = vmatprep.subr.bf16.mxu0 0
    %381 = vmatpush1.bf16.msra.mxu0 %v353
    %382 = vmatprep.subr.bf16.mxu0 0
    %383 = vmatpush1.bf16.msra.mxu0 %v352
    %384 = vmatprep.subr.bf16.mxu0 0
    %385 = vmatpush2.bf16.msra.mxu0 0
    %386 = vmatprep.subr.bf16.mxu0 0
    %387 = vmatpush2.bf16.msra.mxu0 0
    %388 = vmatprep.subr.bf16.mxu0 0
    %389 = vmatpush2.bf16.msra.mxu0 0
    %390 = vmatprep.subr.bf16.mxu0 0
    %391 = vmatpush2.bf16.msra.mxu0 0
    %392 = vmatprep.subr.bf16.mxu0 0
    %393 = vmatpush2.bf16.msra.mxu0 0
    %394 = vmatprep.subr.bf16.mxu0 0
    %395 = vmatpush2.bf16.msra.mxu0 0
    %396 = vmatprep.subr.bf16.mxu0 0
    %397 = vmatpush2.bf16.msra.mxu0 0
    %398 = vmatprep.subr.bf16.mxu0 0
    %399 = vmatpush2.bf16.msra.mxu0 0
    %400 = vmatprep.mubr.bf16.mxu0 0
    %401 = vmatmul.mubr.bf16.gmra.mxu0 %v298
    %v402 = vpop.f32.mrf.mxu0
    %v403 = vadd.f32 %v319, %v402
    %v404 = vpop.f32.mrf.mxu0
    %v405 = vpop.f32.mrf.mxu0
    %v406 = vpop.f32.mrf.mxu0
    %407 = vdwg.mxu0
    %408 = vst [vmem:[#allocation10] sm:$0xff] %v403
    // Predicated region
    $region38: #{tpu_custom_call.1} parent=1 // pred_check
      _
    $region39: #{tpu_custom_call.1} parent=1 // pred_check_branch
      %410 = sbr.rel (0) target = $region41
    $region40: #{tpu_custom_call.1} parent=1 // pred_region
      %s412 = ssub.s32 128, 128
      %413 = vsyncadd [#allocation4], %s412
      %s415 = sshll.u32 [#allocation10], 4
      %s416 = int_to_ptr.vmem [resolvable:$true] %s415
      %418 = dma.vmem_to_hbm [thread:$0]  %s416, 128, %s5, [#allocation4]
    $region41: #{tpu_custom_call.1} parent=1 // pred_fallthru
      _
    // Predicated region
    $region42: #{tpu_custom_call.1} parent=1 // pred_check
      _
    $region43: #{tpu_custom_call.1} parent=1 // pred_check_branch
      %420 = sbr.rel (0) target = $region45
    $region44: #{tpu_custom_call.1} parent=1 // pred_region
      %421 = dma.done [#allocation4], 128
    $region45: #{tpu_custom_call.1} parent=1 // pred_fallthru
      _
    %422 = vsyncpa [#allocation3], 1
    %423 = vsyncpa [#allocation6], 1
    %424 = vsyncpa [#allocation9], 1
    %425 = vsyncpa [#allocation4], 1

</llo_original>
